<compile_context>
chip_gen: v7x
topology: tpu7x:2x2x1
jax: 0.10.0
libtpu: 0.0.40
codegen_flags: <defaults>
</compile_context>

<pallas_src>
import functools

import jax
import jax.numpy as jnp
from jax.experimental import pallas as pl
from jax.experimental.pallas import tpu as pltpu


def _round_up(x, m):
    return (x + m - 1) // m * m


def _resample_loss_kernel(cls_ref, lab_ref, fi_ref, ib_ref, out_ref, *,
                          map_alpha, map_beta, map_gamma, neg_scale,
                          focal, focal_gamma, tile_n, c_pad,
                          mask_rows, mask_cols, n_valid_rows, n_valid_cols):
    i = pl.program_id(0)

    x = cls_ref[...].astype(jnp.float32)       # (TN, Cp) logits
    y = lab_ref[...].astype(jnp.float32)       # (TN, Cp) binary labels (exactly 0/1)
    fi = fi_ref[...]                           # (1, Cp)  1 / class_freq (padded cols = 1)
    ib = ib_ref[...]                           # (1, Cp)  init bias      (padded cols = 0)

    # --- rebalance_weight (uses the *original* labels) ------------------------
    rr = jnp.sum(y * fi, axis=1, keepdims=True)        # (TN, 1)
    rr = jnp.maximum(rr, 1e-12)                        # guard all-negative / padded rows
    # Cheap EUP reciprocal on the (TN, 1) vector, Newton-refined to ~f32 accuracy,
    # then a single broadcast multiply instead of a full (TN, Cp) divide.
    inv_rr = pl.reciprocal(rr, approx=True)
    inv_rr = inv_rr * (2.0 - rr * inv_rr)
    inv_rr = inv_rr * (2.0 - rr * inv_rr)
    pos_weight = fi * inv_rr                           # (TN, Cp)
    w = jax.nn.sigmoid(map_beta * (pos_weight - map_gamma)) + map_alpha

    # --- logit_reg_functions ---------------------------------------------------
    # Labels are exactly {0,1}, so these fused forms equal the reference's
    # x*(1-y)*ns + x*y  and  w/ns*(1-y) + w*y  (fewer VPU passes, no divide).
    x = x + ib
    x = x * (neg_scale + (1.0 - neg_scale) * y)
    w = w * ((1.0 / neg_scale) + (1.0 - 1.0 / neg_scale) * y)

    # --- numerically stable BCE with logits -----------------------------------
    bce = jnp.maximum(x, 0.0) - x * y + jnp.log1p(jnp.exp(-jnp.abs(x)))

    if focal:
        pt = jnp.exp(-bce)   # TODO(synk): could reuse exp(-|x|) via the sigmoid identity
        one_m_pt = 1.0 - pt
        g = float(focal_gamma)
        if g == int(g) and 0 <= int(g) <= 4:
            gi = int(g)
            if gi == 0:
                loss = w * bce
            else:
                mod = one_m_pt
                for _ in range(gi - 1):            # integer gamma -> VPU multiplies,
                    mod = mod * one_m_pt           # no pow = exp(log(.)) on the EUP
                loss = mod * (w * bce)
        else:
            loss = (one_m_pt ** g) * (w * bce)
    else:
        loss = w * bce
    # balance_param / loss_weight / (1/(N*C)) are folded into one host-side constant.

    # --- mask padded rows / columns (statically skipped when there is none) ----
    if mask_rows or mask_cols:
        ok = None
        if mask_rows:
            row_ids = jax.lax.broadcasted_iota(jnp.int32, (tile_n, 1), 0) + i * tile_n
            ok = row_ids < n_valid_rows
        if mask_cols:
            col_ok = jax.lax.broadcasted_iota(jnp.int32, (1, c_pad), 1) < n_valid_cols
            ok = col_ok if ok is None else (ok & col_ok)
        loss = jnp.where(ok, loss, 0.0)

    # --- per-tile partial reduction (VPU only; sublane-/lane-aligned slices) ---
    psum = loss[0:8, :]
    for r in range(8, tile_n, 8):
        psum = psum + loss[r:r + 8, :]            # (8, Cp)
    slab = psum[:, 0:128]
    for g128 in range(1, c_pad // 128):
        slab = slab + psum[:, g128 * 128:(g128 + 1) * 128]
    out_ref[...] = slab                           # (8, 128) lane-dense block store


def resample_loss(cls_score, label, freq_inv, init_bias, *,
                  map_alpha, map_beta, map_gamma, neg_scale,
                  focal, focal_gamma, balance_param, loss_weight, tile_n=None):
    N, C = cls_score.shape
    C_pad = _round_up(C, 128)

    # Row-tile granularity: 8/16/32 rows for 4/2/1-byte inputs (sublane packing).
    itemsize = min(cls_score.dtype.itemsize, label.dtype.itemsize)
    row_align = max(8, 32 // max(itemsize, 1))

    # Size the row tile against a VMEM budget that is safe on every generation
    # (v5e/v6e: 128 MiB physical, v7x: 64 MiB).  2 inputs x 2 pipeline buffers.
    bytes_per_row = C_pad * (cls_score.dtype.itemsize + label.dtype.itemsize)
    input_budget = 24 << 20
    tile_cap = max(row_align,
                   (input_budget // (2 * bytes_per_row)) // row_align * row_align)
    if tile_n is None:
        tile_n = 512                     # large tiles: ~85% of HBM roofline vs <30% at 8
    tile_n = max(row_align,
                 (min(int(tile_n), _round_up(N, row_align), tile_cap)
                  // row_align) * row_align)

    num_tiles = -(-N // tile_n)
    N_pad = num_tiles * tile_n

    # Inputs stay in their native dtype (bf16/int8 halve/quarter HBM traffic);
    # the kernel casts to f32 internally.
    if N_pad != N or C_pad != C:
        cls_score = jnp.pad(cls_score, ((0, N_pad - N), (0, C_pad - C)))
        label = jnp.pad(label, ((0, N_pad - N), (0, C_pad - C)))
    fi = jnp.pad(freq_inv.astype(jnp.float32).reshape(-1), (0, C_pad - C),
                 constant_values=1.0).reshape(1, C_pad)
    ib = jnp.pad(init_bias.astype(jnp.float32).reshape(-1),
                 (0, C_pad - C)).reshape(1, C_pad)

    kernel = functools.partial(
        _resample_loss_kernel,
        map_alpha=float(map_alpha), map_beta=float(map_beta), map_gamma=float(map_gamma),
        neg_scale=float(neg_scale), focal=bool(focal), focal_gamma=float(focal_gamma),
        tile_n=int(tile_n), c_pad=int(C_pad),
        mask_rows=(N_pad != N), mask_cols=(C_pad != C),
        n_valid_rows=int(N), n_valid_cols=int(C))

    # Explicit VMEM ceiling (don't rely on the 16/32 MiB scoped defaults).
    vmem_bytes = 2 * tile_n * bytes_per_row + 4 * (2 * C_pad * 4) + 2 * (8 * 128 * 4)
    vmem_limit = int(min(max(vmem_bytes + (8 << 20), 16 << 20), 48 << 20))

    partials = pl.pallas_call(
        kernel,
        out_shape=jax.ShapeDtypeStruct((num_tiles * 8, 128), jnp.float32),
        grid_spec=pltpu.PrefetchScalarGridSpec(
            num_scalar_prefetch=0,
            grid=(num_tiles,),
            in_specs=[
                pl.BlockSpec((tile_n, C_pad), lambda i: (i, 0)),   # logits tile
                pl.BlockSpec((tile_n, C_pad), lambda i: (i, 0)),   # label tile
                pl.BlockSpec((1, C_pad), lambda i: (0, 0)),        # freq_inv (resident)
                pl.BlockSpec((1, C_pad), lambda i: (0, 0)),        # init_bias (resident)
            ],
            out_specs=pl.BlockSpec((8, 128), lambda i: (i, 0)),    # per-tile partial slab
        ),
        compiler_params=pltpu.CompilerParams(
            dimension_semantics=("parallel",),                      # megacore on v7x
            vmem_limit_bytes=vmem_limit),
    )(cls_score, label, fi, ib)

    # Folded constants applied once to the final scalar.
    scale = float(loss_weight) * (float(balance_param) if focal else 1.0) / float(N * C)
    return jnp.sum(partials) * scale


def resample_loss_ref(cls_score, label, freq_inv, init_bias, *,
                      map_alpha, map_beta, map_gamma, neg_scale,
                      focal, focal_gamma, balance_param, loss_weight):
    """Pure-JAX reference mirroring the PyTorch forward."""
    x = cls_score.astype(jnp.float32)
    y = label.astype(jnp.float32)
    repeat_rate = jnp.sum(y * freq_inv[None, :], axis=1, keepdims=True)
    pos_weight = freq_inv[None, :] / repeat_rate
    w = jax.nn.sigmoid(map_beta * (pos_weight - map_gamma)) + map_alpha
    x = x + init_bias[None, :]
    x = x * (1.0 - y) * neg_scale + x * y
    w = w / neg_scale * (1.0 - y) + w * y
    bce = jnp.maximum(x, 0.0) - x * y + jnp.log1p(jnp.exp(-jnp.abs(x)))
    if focal:
        pt = jnp.exp(-bce)
        loss = balance_param * (1.0 - pt) ** focal_gamma * (w * bce)
    else:
        loss = w * bce
    return jnp.mean(loss_weight * loss)


if __name__ == "__main__":
    # Small shapes: N samples x C classes (C deliberately > 128 to exercise lane folding).
    N, C = 48, 256
    key = jax.random.PRNGKey(0)
    k1, k2, k3, k4 = jax.random.split(key, 4)

    # Deterministic synthetic "class frequency" parameters (the module loads these
    # from a freq file; here we synthesize them in-script).
    class_freq = jax.random.randint(k1, (C,), 5, 60).astype(jnp.float32)
    neg_class_freq = jax.random.randint(k2, (C,), 100, 400).astype(jnp.float32)
    train_num = class_freq[0] + neg_class_freq[0]

    # Typical DB-loss hyperparameters.
    args = dict(loss_weight=1.0, focal=True, focal_gamma=2.0, balance_param=2.0,
                map_alpha=0.1, map_beta=10.0, map_gamma=0.2, neg_scale=2.0)
    init_bias_scale = 0.05

    freq_inv = 1.0 / class_freq
    init_bias = -jnp.log(train_num / class_freq - 1.0) * init_bias_scale / args["neg_scale"]

    # Logits and multi-hot labels (every row has at least one positive, matching
    # the module's implicit assumption — all-negative rows divide by zero in PyTorch).
    cls_score = jax.random.normal(k3, (N, C), dtype=jnp.float32)
    label = (jax.random.uniform(k4, (N, C)) < 0.3).astype(jnp.float32)
    label = label.at[:, 0].set(1.0)

    # Focal branch with an explicit small tile: exercises multi-tile parallel grid
    # and the row-padding mask (N=48 padded to 64 with tile_n=32).
    out1 = resample_loss(cls_score, label, freq_inv, init_bias, tile_n=32, **args)
    jax.block_until_ready(out1)
    ref1 = resample_loss_ref(cls_score, label, freq_inv, init_bias, **args)
    assert jnp.allclose(out1, ref1, rtol=1e-5, atol=1e-6), (out1, ref1)

    # Auto tile size + non-focal branch.
    args2 = dict(args, focal=False)
    out2 = resample_loss(cls_score, label, freq_inv, init_bias, **args2)
    jax.block_until_ready(out2)
    ref2 = resample_loss_ref(cls_score, label, freq_inv, init_bias, **args2)
    assert jnp.allclose(out2, ref2, rtol=1e-5, atol=1e-6), (out2, ref2)

    print("KERNEL_OK")
</pallas_src>

<mosaic_0001>
module attributes {stable_mosaic.version = 11 : i64} {
  func.func @_resample_loss_kernel(%arg0: i32, %arg1: memref<32x256xf32, #tpu.memory_space<vmem>>, %arg2: memref<32x256xf32, #tpu.memory_space<vmem>>, %arg3: memref<1x256xf32, #tpu.memory_space<vmem>>, %arg4: memref<1x256xf32, #tpu.memory_space<vmem>>, %arg5: memref<8x128xf32, #tpu.memory_space<vmem>>) attributes {dimension_semantics = [#tpu.dimension_semantics<parallel>], iteration_bounds = array<i64: 2>, scalar_prefetch = 0 : i64, scratch_operands = 0 : i64, tpu.core_type = #tpu.core_type<tc>, window_params = [{transform_indices = @transform_0, window_bounds = array<i64: 32, 256>}, {transform_indices = @transform_1, window_bounds = array<i64: 32, 256>}, {pipeline_mode = #tpu.pipeline_mode<synchronous>, transform_indices = @transform_2, window_bounds = array<i64: 1, 256>}, {pipeline_mode = #tpu.pipeline_mode<synchronous>, transform_indices = @transform_3, window_bounds = array<i64: 1, 256>}, {transform_indices = @transform_4, window_bounds = array<i64: 8, 128>}]} {
    %c0 = arith.constant 0 : index
    %c0_0 = arith.constant 0 : index
    %0 = vector.load %arg1[%c0, %c0_0] : memref<32x256xf32, #tpu.memory_space<vmem>>, vector<32x256xf32>
    %c0_1 = arith.constant 0 : index
    %c0_2 = arith.constant 0 : index
    %1 = vector.load %arg2[%c0_1, %c0_2] : memref<32x256xf32, #tpu.memory_space<vmem>>, vector<32x256xf32>
    %c0_3 = arith.constant 0 : index
    %c0_4 = arith.constant 0 : index
    %2 = vector.load %arg3[%c0_3, %c0_4] : memref<1x256xf32, #tpu.memory_space<vmem>>, vector<1x256xf32>
    %c0_5 = arith.constant 0 : index
    %c0_6 = arith.constant 0 : index
    %3 = vector.load %arg4[%c0_5, %c0_6] : memref<1x256xf32, #tpu.memory_space<vmem>>, vector<1x256xf32>
    %4 = vector.broadcast %2 : vector<1x256xf32> to vector<32x256xf32>
    %5 = arith.mulf %1, %4 : vector<32x256xf32>
    %cst = arith.constant dense<0.000000e+00> : vector<32xf32>
    %6 = vector.multi_reduction <add>, %5, %cst [1] : vector<32x256xf32> to vector<32xf32>
    %7 = vector.shape_cast %6 : vector<32xf32> to vector<32x1xf32>
    %cst_7 = arith.constant 9.99999996E-13 : f32
    %8 = vector.broadcast %cst_7 : f32 to vector<32x1xf32>
    %9 = arith.maximumf %7, %8 : vector<32x1xf32>
    %10 = tpu.reciprocal %9 {approx = true} : vector<32x1xf32> -> vector<32x1xf32>
    %11 = arith.mulf %9, %10 : vector<32x1xf32>
    %cst_8 = arith.constant 2.000000e+00 : f32
    %12 = vector.broadcast %cst_8 : f32 to vector<32x1xf32>
    %13 = arith.subf %12, %11 : vector<32x1xf32>
    %14 = arith.mulf %10, %13 : vector<32x1xf32>
    %15 = arith.mulf %9, %14 : vector<32x1xf32>
    %cst_9 = arith.constant 2.000000e+00 : f32
    %16 = vector.broadcast %cst_9 : f32 to vector<32x1xf32>
    %17 = arith.subf %16, %15 : vector<32x1xf32>
    %18 = arith.mulf %14, %17 : vector<32x1xf32>
    %19 = vector.broadcast %2 : vector<1x256xf32> to vector<32x256xf32>
    %20 = vector.broadcast %18 : vector<32x1xf32> to vector<32x256xf32>
    %21 = arith.mulf %19, %20 : vector<32x256xf32>
    %cst_10 = arith.constant 2.000000e-01 : f32
    %22 = vector.broadcast %cst_10 : f32 to vector<32x256xf32>
    %23 = arith.subf %21, %22 : vector<32x256xf32>
    %cst_11 = arith.constant 1.000000e+01 : f32
    %24 = vector.broadcast %cst_11 : f32 to vector<32x256xf32>
    %25 = arith.mulf %24, %23 : vector<32x256xf32>
    %26 = arith.negf %25 : vector<32x256xf32>
    %27 = math.exp %26 : vector<32x256xf32>
    %cst_12 = arith.constant 1.000000e+00 : f32
    %28 = vector.broadcast %cst_12 : f32 to vector<32x256xf32>
    %29 = arith.addf %28, %27 : vector<32x256xf32>
    %30 = arith.divf %28, %29 : vector<32x256xf32>
    %cst_13 = arith.constant 1.000000e-01 : f32
    %31 = vector.broadcast %cst_13 : f32 to vector<32x256xf32>
    %32 = arith.addf %30, %31 : vector<32x256xf32>
    %33 = vector.broadcast %3 : vector<1x256xf32> to vector<32x256xf32>
    %34 = arith.addf %0, %33 : vector<32x256xf32>
    %cst_14 = arith.constant -1.000000e+00 : f32
    %35 = vector.broadcast %cst_14 : f32 to vector<32x256xf32>
    %36 = arith.mulf %35, %1 : vector<32x256xf32>
    %cst_15 = arith.constant 2.000000e+00 : f32
    %37 = vector.broadcast %cst_15 : f32 to vector<32x256xf32>
    %38 = arith.addf %37, %36 : vector<32x256xf32>
    %39 = arith.mulf %34, %38 : vector<32x256xf32>
    %cst_16 = arith.constant 5.000000e-01 : f32
    %40 = vector.broadcast %cst_16 : f32 to vector<32x256xf32>
    %41 = arith.mulf %40, %1 : vector<32x256xf32>
    %cst_17 = arith.constant 5.000000e-01 : f32
    %42 = vector.broadcast %cst_17 : f32 to vector<32x256xf32>
    %43 = arith.addf %42, %41 : vector<32x256xf32>
    %44 = arith.mulf %32, %43 : vector<32x256xf32>
    %cst_18 = arith.constant 0.000000e+00 : f32
    %45 = vector.broadcast %cst_18 : f32 to vector<32x256xf32>
    %46 = arith.maximumf %39, %45 : vector<32x256xf32>
    %47 = arith.mulf %39, %1 : vector<32x256xf32>
    %48 = arith.subf %46, %47 : vector<32x256xf32>
    %49 = math.absf %39 : vector<32x256xf32>
    %cst_19 = arith.constant 0.000000e+00 : f32
    %50 = vector.broadcast %cst_19 : f32 to vector<32x256xf32>
    %51 = arith.subf %50, %49 : vector<32x256xf32>
    %52 = math.exp %51 : vector<32x256xf32>
    %53 = math.log1p %52 : vector<32x256xf32>
    %54 = arith.addf %48, %53 : vector<32x256xf32>
    %cst_20 = arith.constant 0.000000e+00 : f32
    %55 = vector.broadcast %cst_20 : f32 to vector<32x256xf32>
    %56 = arith.subf %55, %54 : vector<32x256xf32>
    %57 = math.exp %56 : vector<32x256xf32>
    %cst_21 = arith.constant 1.000000e+00 : f32
    %58 = vector.broadcast %cst_21 : f32 to vector<32x256xf32>
    %59 = arith.subf %58, %57 : vector<32x256xf32>
    %60 = arith.mulf %59, %59 : vector<32x256xf32>
    %61 = arith.mulf %44, %54 : vector<32x256xf32>
    %62 = arith.mulf %60, %61 : vector<32x256xf32>
    %63 = tpu.iota {dimensions = array<i32: 0>} : vector<32x1xi32>
    %c32_i32 = arith.constant 32 : i32
    %64 = arith.muli %arg0, %c32_i32 : i32
    %65 = vector.broadcast %64 : i32 to vector<32x1xi32>
    %66 = arith.addi %63, %65 : vector<32x1xi32>
    %c48_i32 = arith.constant 48 : i32
    %67 = vector.broadcast %c48_i32 : i32 to vector<32x1xi32>
    %68 = arith.cmpi slt, %66, %67 : vector<32x1xi32>
    %cst_22 = arith.constant 0.000000e+00 : f32
    %69 = vector.shape_cast %68 : vector<32x1xi1> to vector<32x1xi1>
    %70 = vector.broadcast %69 : vector<32x1xi1> to vector<32x256xi1>
    %71 = vector.broadcast %cst_22 : f32 to vector<32x256xf32>
    %72 = arith.select %70, %62, %71 : vector<32x256xi1>, vector<32x256xf32>
    %73 = vector.extract_strided_slice %72 {offsets = [0, 0], sizes = [8, 256], strides = [1, 1]} : vector<32x256xf32> to vector<8x256xf32>
    %74 = vector.extract_strided_slice %72 {offsets = [8, 0], sizes = [8, 256], strides = [1, 1]} : vector<32x256xf32> to vector<8x256xf32>
    %75 = arith.addf %73, %74 : vector<8x256xf32>
    %76 = vector.extract_strided_slice %72 {offsets = [16, 0], sizes = [8, 256], strides = [1, 1]} : vector<32x256xf32> to vector<8x256xf32>
    %77 = arith.addf %75, %76 : vector<8x256xf32>
    %78 = vector.extract_strided_slice %72 {offsets = [24, 0], sizes = [8, 256], strides = [1, 1]} : vector<32x256xf32> to vector<8x256xf32>
    %79 = arith.addf %77, %78 : vector<8x256xf32>
    %80 = vector.extract_strided_slice %79 {offsets = [0, 0], sizes = [8, 128], strides = [1, 1]} : vector<8x256xf32> to vector<8x128xf32>
    %81 = vector.extract_strided_slice %79 {offsets = [0, 128], sizes = [8, 128], strides = [1, 1]} : vector<8x256xf32> to vector<8x128xf32>
    %82 = arith.addf %80, %81 : vector<8x128xf32>
    %c0_23 = arith.constant 0 : index
    %c0_24 = arith.constant 0 : index
    %83 = vector.load %arg5[%c0_23, %c0_24] : memref<8x128xf32, #tpu.memory_space<vmem>>, vector<8x128xf32>
    tpu.vector_store %arg5[%c0_23, %c0_24], %82 {strides = array<i32>} : memref<8x128xf32, #tpu.memory_space<vmem>>, vector<8x128xf32>,
    return
  }
  func.func @transform_0(%arg0: i32) -> (i32, i32) {
    %c0_i32 = arith.constant 0 : i32
    %c0_i32_0 = arith.constant 0 : i32
    return %arg0, %c0_i32 : i32, i32
  }
  func.func @transform_1(%arg0: i32) -> (i32, i32) {
    %c0_i32 = arith.constant 0 : i32
    %c0_i32_0 = arith.constant 0 : i32
    return %arg0, %c0_i32 : i32, i32
  }
  func.func @transform_2(%arg0: i32) -> (i32, i32) {
    %c0_i32 = arith.constant 0 : i32
    %c0_i32_0 = arith.constant 0 : i32
    %c0_i32_1 = arith.constant 0 : i32
    return %c0_i32, %c0_i32_0 : i32, i32
  }
  func.func @transform_3(%arg0: i32) -> (i32, i32) {
    %c0_i32 = arith.constant 0 : i32
    %c0_i32_0 = arith.constant 0 : i32
    %c0_i32_1 = arith.constant 0 : i32
    return %c0_i32, %c0_i32_0 : i32, i32
  }
  func.func @transform_4(%arg0: i32) -> (i32, i32) {
    %c0_i32 = arith.constant 0 : i32
    %c0_i32_0 = arith.constant 0 : i32
    return %arg0, %c0_i32 : i32, i32
  }
}

</mosaic_0001>

<llo_original>
// kernel: tpu_custom_call.1
$region0: #{tpu_custom_call.1}
  #allocation0 [shape = 'u32[]', space=smem, size = 0x4, offset = 0x4, fixed_abs, tag = 'smem constant byte address 0x4 - core index']
  #allocation1 [shape = 'u32[144,128]{1,0:T(1,128)}', space=vmem, size = 0x12000, scoped, tag = 'internal scratch']
  %s0 = inlined_call_operand.hbm [shape: f32[64,256], index: 0, kind: input, shape index: {}]
  %s1 = inlined_call_operand.hbm [shape: f32[64,256], index: 1, kind: input, shape index: {}]
  %s2 = inlined_call_operand.vmem [shape: f32[1,256], index: 2, kind: input, shape index: {}]
  %s3 = inlined_call_operand.vmem [shape: f32[1,256], index: 3, kind: input, shape index: {}]
  %s4 = inlined_call_operand.hbm [shape: f32[16,128], index: 4, kind: output, shape index: {}]
  %s5 = sld [smem:[#allocation0]]
  $region57: #{tpu_custom_call.1} parent=0
    _
  %s7 = ssub.s32 1, %s5
  %s8 = scalar_select 0, %s7, %s5
  $region1: #{tpu_custom_call.1} parent=0
    #allocation2 [shape = 'u8[65536]{0}', space=vmem, size = 0x10000, scoped, tag = 'input window, operand 0']
    #allocation3 [shape = 's32[2]{0}', space=sflag, size = 0x8, scoped, tag = 'scoped memory for tpu_custom_call.1']
    #allocation4 [shape = 's32[2]{0}', space=sflag, size = 0x8, scoped, tag = 'scoped memory for tpu_custom_call.1']
    #allocation5 [shape = 'u8[65536]{0}', space=vmem, size = 0x10000, scoped, tag = 'input window, operand 1']
    #allocation6 [shape = 's32[2]{0}', space=sflag, size = 0x8, scoped, tag = 'scoped memory for tpu_custom_call.1']
    #allocation7 [shape = 'u8[8192]{0}', space=vmem, size = 0x2000, scoped, tag = 'output window, operand 0']
    %9 = vsyncpa [#allocation3], 0
    %s10 = scalar_lea.sflag [#allocation3], 1
    %11 = vsyncpa %s10, 0
    %12 = vsyncpa [#allocation6], 0
    %s13 = scalar_lea.sflag [#allocation6], 1
    %14 = vsyncpa %s13, 0
    %15 = vsyncpa [#allocation4], 0
    %s16 = scalar_lea.sflag [#allocation4], 1
    %17 = vsyncpa %s16, 0
    loop: start=0, step=1, limit=4
    $region2: #{tpu_custom_call.1} parent=1 // loop_pre_header
      _
    $region3: #{tpu_custom_call.1} parent=1 // loop_header
      %s19 = sphi 0, %s23
      %p20 = scmp.ge.s32.totalorder %s19, 4
      %s29 = sphi 0, %s31
      %s32 = sphi 0, %s29
      %s33 = sphi 0, %s32
      %s49 = sphi 0, %s33
      %s55 = sphi 0, %s57
      %s58 = sphi 0, %s55
      %s59 = sphi 0, %s58
      %s75 = sphi 0, %s59
      %s79 = sphi 0, %s79
      %s81 = sphi 0, %s79
      %s82 = sphi 0, %s81
      %s96 = sphi 0, %s82
      %s100 = sphi 0, %s100
      %s102 = sphi 0, %s100
      %s103 = sphi 0, %s102
      %s117 = sphi 0, %s103
      %s123 = sphi 0, %s125
      %s126 = sphi 0, %s123
      %s127 = sphi 0, %s126
      %s143 = sphi 0, %s127
    $region4: #{tpu_custom_call.1} parent=1 // loop_header_branch
      %22 = sbr.rel (%p20) target = $region8
    $region5: #{tpu_custom_call.1} parent=1 // loop_body
      %s24 = ssub.s32 %s19, 1
      %s25 = ssub.s32 %s19, 2
      %s26 = sadd.s32 %s19, 1
      %s27 = ssub.s32 %s19, %s26
      %p28 = scmp.eq.s32.totalorder %s27, 0
      %s30 = sadd.s32 %s29, 1
      %s31 = scalar_select %p28, %s29, %s30
      %p34 = pneg %p28
      %p35 = scmp.eq.s32.totalorder %s19, 1
      %p36 = por %p34, %p35
      %p37 = scmp.ne.s32.totalorder %s29, %s32
      %p38 = scmp.eq.s32.totalorder %s19, 0
      %p39 = por %p37, %p38
      %p40 = scmp.ne.s32.totalorder %s29, %s32
      %p41 = scmp.eq.s32.totalorder %s24, 1
      %p42 = por %p40, %p41
      %p43 = scmp.ne.s32.totalorder %s32, %s33
      %p44 = scmp.eq.s32.totalorder %s24, 0
      %p45 = por %p43, %p44
      %p46 = scmp.ne.s32.totalorder %s32, %s33
      %p47 = scmp.eq.s32.totalorder %s25, 1
      %p48 = por %p46, %p47
      %p50 = scmp.ne.s32.totalorder %s33, %s49
      %p51 = scmp.eq.s32.totalorder %s25, 0
      %p52 = por %p50, %p51
      %s53 = ssub.s32 %s19, %s26
      %p54 = scmp.eq.s32.totalorder %s53, 0
      %s56 = sadd.s32 %s55, 1
      %s57 = scalar_select %p54, %s55, %s56
      %p60 = pneg %p54
      %p61 = scmp.eq.s32.totalorder %s19, 1
      %p62 = por %p60, %p61
      %p63 = scmp.ne.s32.totalorder %s55, %s58
      %p64 = scmp.eq.s32.totalorder %s19, 0
      %p65 = por %p63, %p64
      %p66 = scmp.ne.s32.totalorder %s55, %s58
      %p67 = scmp.eq.s32.totalorder %s24, 1
      %p68 = por %p66, %p67
      %p69 = scmp.ne.s32.totalorder %s58, %s59
      %p70 = scmp.eq.s32.totalorder %s24, 0
      %p71 = por %p69, %p70
      %p72 = scmp.ne.s32.totalorder %s58, %s59
      %p73 = scmp.eq.s32.totalorder %s25, 1
      %p74 = por %p72, %p73
      %p76 = scmp.ne.s32.totalorder %s59, %s75
      %p77 = scmp.eq.s32.totalorder %s25, 0
      %p78 = por %p76, %p77
      %s80 = sadd.s32 %s79, 1
      %p83 = scmp.eq.s32.totalorder %s19, 1
      %p84 = scmp.ne.s32.totalorder %s79, %s81
      %p85 = scmp.eq.s32.totalorder %s19, 0
      %p86 = por %p84, %p85
      %p87 = scmp.ne.s32.totalorder %s79, %s81
      %p88 = scmp.eq.s32.totalorder %s24, 1
      %p89 = por %p87, %p88
      %p90 = scmp.ne.s32.totalorder %s81, %s82
      %p91 = scmp.eq.s32.totalorder %s24, 0
      %p92 = por %p90, %p91
      %p93 = scmp.ne.s32.totalorder %s81, %s82
      %p94 = scmp.eq.s32.totalorder %s25, 1
      %p95 = por %p93, %p94
      %p97 = scmp.ne.s32.totalorder %s82, %s96
      %p98 = scmp.eq.s32.totalorder %s25, 0
      %p99 = por %p97, %p98
      %s101 = sadd.s32 %s100, 1
      %p104 = scmp.eq.s32.totalorder %s19, 1
      %p105 = scmp.ne.s32.totalorder %s100, %s102
      %p106 = scmp.eq.s32.totalorder %s19, 0
      %p107 = por %p105, %p106
      %p108 = scmp.ne.s32.totalorder %s100, %s102
      %p109 = scmp.eq.s32.totalorder %s24, 1
      %p110 = por %p108, %p109
      %p111 = scmp.ne.s32.totalorder %s102, %s103
      %p112 = scmp.eq.s32.totalorder %s24, 0
      %p113 = por %p111, %p112
      %p114 = scmp.ne.s32.totalorder %s102, %s103
      %p115 = scmp.eq.s32.totalorder %s25, 1
      %p116 = por %p114, %p115
      %p118 = scmp.ne.s32.totalorder %s103, %s117
      %p119 = scmp.eq.s32.totalorder %s25, 0
      %p120 = por %p118, %p119
      %s121 = ssub.s32 %s19, %s26
      %p122 = scmp.eq.s32.totalorder %s121, 0
      %s124 = sadd.s32 %s123, 1
      %s125 = scalar_select %p122, %s123, %s124
      %p128 = pneg %p122
      %p129 = scmp.eq.s32.totalorder %s19, 1
      %p130 = por %p128, %p129
      %p131 = scmp.ne.s32.totalorder %s123, %s126
      %p132 = scmp.eq.s32.totalorder %s19, 0
      %p133 = por %p131, %p132
      %p134 = scmp.ne.s32.totalorder %s123, %s126
      %p135 = scmp.eq.s32.totalorder %s24, 1
      %p136 = por %p134, %p135
      %p137 = scmp.ne.s32.totalorder %s126, %s127
      %p138 = scmp.eq.s32.totalorder %s24, 0
      %p139 = por %p137, %p138
      %p140 = scmp.ne.s32.totalorder %s126, %s127
      %p141 = scmp.eq.s32.totalorder %s25, 1
      %p142 = por %p140, %p141
      %p144 = scmp.ne.s32.totalorder %s127, %s143
      %p145 = scmp.eq.s32.totalorder %s25, 0
      %p146 = por %p144, %p145
      %p147 = scmp.le.s32.totalorder 1, %s19
      %p148 = scmp.lt.s32.totalorder %s19, 3
      %p149 = pnand %p147, %p148
      %p150 = pneg %p149
      // Predicated region
      $region9: #{tpu_custom_call.1} parent=5 // pred_check
        _
      $region10: #{tpu_custom_call.1} parent=5 // pred_check_branch
        %152 = sbr.rel (%p149) target = $region12
      $region11: #{tpu_custom_call.1} parent=5 // pred_region
        %s153 = ssub.s32 %s19, 1
        // Predicated region
        $region13: #{tpu_custom_call.1} parent=11 // pred_check
          %p154 = pneg %p92
        $region14: #{tpu_custom_call.1} parent=11 // pred_check_branch
          %156 = sbr.rel (%p154) target = $region16
        $region15: #{tpu_custom_call.1} parent=11 // pred_region
          _
        $region16: #{tpu_custom_call.1} parent=11 // pred_fallthru
          _
        // Predicated region
        $region17: #{tpu_custom_call.1} parent=11 // pred_check
          %p157 = pneg %p113
        $region18: #{tpu_custom_call.1} parent=11 // pred_check_branch
          %159 = sbr.rel (%p157) target = $region20
        $region19: #{tpu_custom_call.1} parent=11 // pred_region
          _
        $region20: #{tpu_custom_call.1} parent=11 // pred_fallthru
          _
      $region12: #{tpu_custom_call.1} parent=5 // pred_fallthru
        _
      %p160 = scmp.lt.s32.totalorder %s19, 2
      // Predicated region
      $region21: #{tpu_custom_call.1} parent=5 // pred_check
        %p161 = pneg %p160
      $region22: #{tpu_custom_call.1} parent=5 // pred_check_branch
        %163 = sbr.rel (%p161) target = $region24
      $region23: #{tpu_custom_call.1} parent=5 // pred_region
        // Predicated region
        $region25: #{tpu_custom_call.1} parent=23 // pred_check
          %p164 = pneg %p39
        $region26: #{tpu_custom_call.1} parent=23 // pred_check_branch
          %166 = sbr.rel (%p164) target = $region28
        $region27: #{tpu_custom_call.1} parent=23 // pred_region
          %s167 = sand.u32 %s29, 1
          %s168 = scalar_lea.sflag [#allocation3], %s167
          %s169 = sand.u32 %s29, 1
          %s170 = smul.addr %s169, 64
          %s171 = scalar_lea.vmem [#allocation2], %s170
          %s172 = smul.u32 4, %s19
          %s174 = ssub.s32 1024, 1024
          %175 = vsyncadd %s168, %s174
          %s176 = smul.addr %s172, 2
          %s177 = smul.addr %s176, 128
          %s178 = scalar_lea.hbm %s0, %s177
          %s179 = sshll.u32 %s171, 4
          %s180 = int_to_ptr.vmem [resolvable:$true] %s179
          %185 = dma.hbm_to_vmem [thread:$0]  %s178, 1024, %s180, %s168, 256, 256, 16
        $region28: #{tpu_custom_call.1} parent=23 // pred_fallthru
          _
        // Predicated region
        $region29: #{tpu_custom_call.1} parent=23 // pred_check
          %p186 = pneg %p65
        $region30: #{tpu_custom_call.1} parent=23 // pred_check_branch
          %188 = sbr.rel (%p186) target = $region32
        $region31: #{tpu_custom_call.1} parent=23 // pred_region
          %s189 = sand.u32 %s55, 1
          %s190 = scalar_lea.sflag [#allocation6], %s189
          %s191 = sand.u32 %s55, 1
          %s192 = smul.addr %s191, 64
          %s193 = scalar_lea.vmem [#allocation5], %s192
          %s194 = smul.u32 4, %s19
          %s196 = ssub.s32 1024, 1024
          %197 = vsyncadd %s190, %s196
          %s198 = smul.addr %s194, 2
          %s199 = smul.addr %s198, 128
          %s200 = scalar_lea.hbm %s1, %s199
          %s201 = sshll.u32 %s193, 4
          %s202 = int_to_ptr.vmem [resolvable:$true] %s201
          %207 = dma.hbm_to_vmem [thread:$0]  %s200, 1024, %s202, %s190, 256, 256, 16
        $region32: #{tpu_custom_call.1} parent=23 // pred_fallthru
          _
      $region24: #{tpu_custom_call.1} parent=5 // pred_fallthru
        _
      %p208 = scmp.le.s32.totalorder 1, %s19
      %p209 = scmp.lt.s32.totalorder %s19, 3
      %p210 = pnand %p208, %p209
      %p211 = pneg %p210
      // Predicated region
      $region33: #{tpu_custom_call.1} parent=5 // pred_check
        _
      $region34: #{tpu_custom_call.1} parent=5 // pred_check_branch
        %213 = sbr.rel (%p210) target = $region36
      $region35: #{tpu_custom_call.1} parent=5 // pred_region
        %s214 = ssub.s32 %s19, 1
        %s215 = sand.u32 %s32, 1
        %s216 = scalar_lea.sflag [#allocation3], %s215
        %s217 = sand.u32 %s32, 1
        %s218 = smul.addr %s217, 64
        %s219 = scalar_lea.vmem [#allocation2], %s218
        // Predicated region
        $region37: #{tpu_custom_call.1} parent=35 // pred_check
          %p220 = pneg %p45
        $region38: #{tpu_custom_call.1} parent=35 // pred_check_branch
          %222 = sbr.rel (%p220) target = $region40
        $region39: #{tpu_custom_call.1} parent=35 // pred_region
          %223 = dma.done %s216, 1024
        $region40: #{tpu_custom_call.1} parent=35 // pred_fallthru
          _
        %s224 = sand.u32 %s58, 1
        %s225 = scalar_lea.sflag [#allocation6], %s224
        %s226 = sand.u32 %s58, 1
        %s227 = smul.addr %s226, 64
        %s228 = scalar_lea.vmem [#allocation5], %s227
        // Predicated region
        $region41: #{tpu_custom_call.1} parent=35 // pred_check
          %p229 = pneg %p71
        $region42: #{tpu_custom_call.1} parent=35 // pred_check_branch
          %231 = sbr.rel (%p229) target = $region44
        $region43: #{tpu_custom_call.1} parent=35 // pred_region
          %232 = dma.done %s225, 1024
        $region44: #{tpu_custom_call.1} parent=35 // pred_fallthru
          _
        %s233 = sand.u32 %s32, 1
        %s234 = scalar_lea.sflag [#allocation3], %s233
        %s235 = sand.u32 %s32, 1
        %s236 = smul.addr %s235, 64
        %s237 = scalar_lea.vmem [#allocation2], %s236
        %p238 = pneg %p45
        %p239 = pneg %p42
        %s240 = sand.u32 %s58, 1
        %s241 = scalar_lea.sflag [#allocation6], %s240
        %s242 = sand.u32 %s58, 1
        %s243 = smul.addr %s242, 64
        %s244 = scalar_lea.vmem [#allocation5], %s243
        %p245 = pneg %p71
        %p246 = pneg %p68
        %p247 = pneg %p92
        %p248 = pneg %p89
        %p249 = pneg %p113
        %p250 = pneg %p110
        %p251 = pneg %p139
        %p252 = pneg %p136
        %s253 = sand.u32 %s126, 1
        %s254 = scalar_lea.sflag [#allocation4], %s253
        %s255 = sand.u32 %s126, 1
        %s256 = smul.addr %s255, 8
        %s257 = scalar_lea.vmem [#allocation7], %s256
        %s258 = smul.u32 4, %s24
        %s259 = smul.u32 4, %s24
        %v260 = vld [vmem:[%s219] sm:$0xff]
        %v261 = vld [vmem:[%s219 + $0x8] sm:$0xff]
        %v262 = vld [vmem:[%s219 + $0x10] sm:$0xff]
        %v263 = vld [vmem:[%s219 + $0x18] sm:$0xff]
        %v264 = vld [vmem:[%s219 + $0x20] sm:$0xff]
        %v265 = vld [vmem:[%s219 + $0x28] sm:$0xff]
        %v266 = vld [vmem:[%s219 + $0x30] sm:$0xff]
        %v267 = vld [vmem:[%s219 + $0x38] sm:$0xff]
        %v268 = vld [vmem:[%s228] sm:$0xff]
        %v269 = vld [vmem:[%s228 + $0x8] sm:$0xff]
        %v270 = vld [vmem:[%s228 + $0x10] sm:$0xff]
        %v271 = vld [vmem:[%s228 + $0x18] sm:$0xff]
        %v272 = vld [vmem:[%s228 + $0x20] sm:$0xff]
        %v273 = vld [vmem:[%s228 + $0x28] sm:$0xff]
        %v274 = vld [vmem:[%s228 + $0x30] sm:$0xff]
        %v275 = vld [vmem:[%s228 + $0x38] sm:$0xff]
        %v276 = vld [vmem:[%s2] sm:$0x3]
        %v277 = vld [vmem:[%s3] sm:$0x3]
        %v279 = vlaneseq
        %v280 = vshrl.u32 %v279, 7
        %v281 = vsub.s32 0, %v280
        %v282 = vrot.slane %v276, %v281
        %v283 = vlaneseq
        %v284 = vshrl.u32 %v283, 7
        %v285 = vsub.s32 1, %v284
        %v286 = vrot.slane %v276, %v285
        %v289 = vmul.f32 %v268, %v282
        %v290 = vmul.f32 %v269, %v286
        %v291 = vmul.f32 %v270, %v282
        %v292 = vmul.f32 %v271, %v286
        %v293 = vmul.f32 %v272, %v282
        %v294 = vmul.f32 %v273, %v286
        %v295 = vmul.f32 %v274, %v282
        %v296 = vmul.f32 %v275, %v286
        %v297 = vadd.f32 %v289, %v290
        %298 = vadd.xlane.f32.xlu0 %v297
        %v299 = vpop.xlane.xlu0 %298
        %v300 = vadd.f32 %v291, %v292
        %301 = vadd.xlane.f32.xlu0 %v300
        %v302 = vpop.xlane.xlu0 %301
        %v303 = vadd.f32 %v293, %v294
        %304 = vadd.xlane.f32.xlu0 %v303
        %v305 = vpop.xlane.xlu0 %304
        %v306 = vadd.f32 %v295, %v296
        %307 = vadd.xlane.f32.xlu0 %v306
        %v308 = vpop.xlane.xlu0 %307
        %v309 = vmax.f32 %v299, 1e-12
        %v310 = vmax.f32 %v302, 1e-12
        %v311 = vmax.f32 %v305, 1e-12
        %v312 = vmax.f32 %v308, 1e-12
        %v313 = vrcp.pop %v309
        %v314 = vrcp.pop %v310
        %v315 = vrcp.pop %v311
        %v316 = vrcp.pop %v312
        %v317 = vmul.f32 %v309, %v313
        %v318 = vmul.f32 %v310, %v314
        %v319 = vmul.f32 %v311, %v315
        %v320 = vmul.f32 %v312, %v316
        %v321 = vsub.f32 2.0, %v317
        %v322 = vsub.f32 2.0, %v318
        %v323 = vsub.f32 2.0, %v319
        %v324 = vsub.f32 2.0, %v320
        %v325 = vmul.f32 %v313, %v321
        %v326 = vmul.f32 %v314, %v322
        %v327 = vmul.f32 %v315, %v323
        %v328 = vmul.f32 %v316, %v324
        %v329 = vmul.f32 %v309, %v325
        %v330 = vmul.f32 %v310, %v326
        %v331 = vmul.f32 %v311, %v327
        %v332 = vmul.f32 %v312, %v328
        %v333 = vsub.f32 2.0, %v329
        %v334 = vsub.f32 2.0, %v330
        %v335 = vsub.f32 2.0, %v331
        %v336 = vsub.f32 2.0, %v332
        %v337 = vmul.f32 %v325, %v333
        %v338 = vmul.f32 %v326, %v334
        %v339 = vmul.f32 %v327, %v335
        %v340 = vmul.f32 %v328, %v336
        %v341 = vmul.f32 %v282, %v337
        %v342 = vmul.f32 %v286, %v337
        %v343 = vmul.f32 %v282, %v338
        %v344 = vmul.f32 %v286, %v338
        %v345 = vmul.f32 %v282, %v339
        %v346 = vmul.f32 %v286, %v339
        %v347 = vmul.f32 %v282, %v340
        %v348 = vmul.f32 %v286, %v340
        %v349 = vsub.f32 %v341, 0.2
        %v350 = vsub.f32 %v342, 0.2
        %v351 = vsub.f32 %v343, 0.2
        %v352 = vsub.f32 %v344, 0.2
        %v353 = vsub.f32 %v345, 0.2
        %v354 = vsub.f32 %v346, 0.2
        %v355 = vsub.f32 %v347, 0.2
        %v356 = vsub.f32 %v348, 0.2
        %v357 = vmul.f32 %v349, 10.0
        %v358 = vmul.f32 %v350, 10.0
        %v359 = vmul.f32 %v351, 10.0
        %v360 = vmul.f32 %v352, 10.0
        %v361 = vmul.f32 %v353, 10.0
        %v362 = vmul.f32 %v354, 10.0
        %v363 = vmul.f32 %v355, 10.0
        %v364 = vmul.f32 %v356, 10.0
        %v365 = vxor.u32 %v357, 2147483648
        %v366 = vxor.u32 %v358, 2147483648
        %v367 = vxor.u32 %v359, 2147483648
        %v368 = vxor.u32 %v360, 2147483648
        %v369 = vxor.u32 %v361, 2147483648
        %v370 = vxor.u32 %v362, 2147483648
        %v371 = vxor.u32 %v363, 2147483648
        %v372 = vxor.u32 %v364, 2147483648
        %v373 = vmul.f32 %v365, 1.442695
        %v374 = vpow.pop %v373
        %v375 = vmul.f32 %v366, 1.442695
        %v376 = vpow.pop %v375
        %v377 = vmul.f32 %v367, 1.442695
        %v378 = vpow.pop %v377
        %v379 = vmul.f32 %v368, 1.442695
        %v380 = vpow.pop %v379
        %v381 = vmul.f32 %v369, 1.442695
        %v382 = vpow.pop %v381
        %v383 = vmul.f32 %v370, 1.442695
        %v384 = vpow.pop %v383
        %v385 = vmul.f32 %v371, 1.442695
        %v386 = vpow.pop %v385
        %v387 = vmul.f32 %v372, 1.442695
        %v388 = vpow.pop %v387
        %v389 = vadd.f32 %v374, 1.0
        %v390 = vadd.f32 %v376, 1.0
        %v391 = vadd.f32 %v378, 1.0
        %v392 = vadd.f32 %v380, 1.0
        %v393 = vadd.f32 %v382, 1.0
        %v394 = vadd.f32 %v384, 1.0
        %v395 = vadd.f32 %v386, 1.0
        %v396 = vadd.f32 %v388, 1.0
        %v397 = vrcp.pop %v389
        %v398 = vmul.f32 1.0, %v397
        %v399 = vrcp.pop %v390
        %v400 = vmul.f32 1.0, %v399
        %v401 = vrcp.pop %v391
        %v402 = vmul.f32 1.0, %v401
        %v403 = vrcp.pop %v392
        %v404 = vmul.f32 1.0, %v403
        %v405 = vrcp.pop %v393
        %v406 = vmul.f32 1.0, %v405
        %v407 = vrcp.pop %v394
        %v408 = vmul.f32 1.0, %v407
        %v409 = vrcp.pop %v395
        %v410 = vmul.f32 1.0, %v409
        %v411 = vrcp.pop %v396
        %v412 = vmul.f32 1.0, %v411
        %v413 = vadd.f32 %v398, 0.1
        %v414 = vadd.f32 %v400, 0.1
        %v415 = vadd.f32 %v402, 0.1
        %v416 = vadd.f32 %v404, 0.1
        %v417 = vadd.f32 %v406, 0.1
        %v418 = vadd.f32 %v408, 0.1
        %v419 = vadd.f32 %v410, 0.1
        %v420 = vadd.f32 %v412, 0.1
        %v422 = vlaneseq
        %v423 = vshrl.u32 %v422, 7
        %v424 = vsub.s32 0, %v423
        %v425 = vrot.slane %v277, %v424
        %v426 = vlaneseq
        %v427 = vshrl.u32 %v426, 7
        %v428 = vsub.s32 1, %v427
        %v429 = vrot.slane %v277, %v428
        %v432 = vadd.f32 %v260, %v425
        %v433 = vadd.f32 %v261, %v429
        %v434 = vadd.f32 %v262, %v425
        %v435 = vadd.f32 %v263, %v429
        %v436 = vadd.f32 %v264, %v425
        %v437 = vadd.f32 %v265, %v429
        %v438 = vadd.f32 %v266, %v425
        %v439 = vadd.f32 %v267, %v429
        %v440 = vmul.f32 %v268, -1.0
        %v441 = vmul.f32 %v269, -1.0
        %v442 = vmul.f32 %v270, -1.0
        %v443 = vmul.f32 %v271, -1.0
        %v444 = vmul.f32 %v272, -1.0
        %v445 = vmul.f32 %v273, -1.0
        %v446 = vmul.f32 %v274, -1.0
        %v447 = vmul.f32 %v275, -1.0
        %v448 = vadd.f32 %v440, 2.0
        %v449 = vadd.f32 %v441, 2.0
        %v450 = vadd.f32 %v442, 2.0
        %v451 = vadd.f32 %v443, 2.0
        %v452 = vadd.f32 %v444, 2.0
        %v453 = vadd.f32 %v445, 2.0
        %v454 = vadd.f32 %v446, 2.0
        %v455 = vadd.f32 %v447, 2.0
        %v456 = vmul.f32 %v432, %v448
        %v457 = vmul.f32 %v433, %v449
        %v458 = vmul.f32 %v434, %v450
        %v459 = vmul.f32 %v435, %v451
        %v460 = vmul.f32 %v436, %v452
        %v461 = vmul.f32 %v437, %v453
        %v462 = vmul.f32 %v438, %v454
        %v463 = vmul.f32 %v439, %v455
        %v464 = vmul.f32 %v268, 0.5
        %v465 = vmul.f32 %v269, 0.5
        %v466 = vmul.f32 %v270, 0.5
        %v467 = vmul.f32 %v271, 0.5
        %v468 = vmul.f32 %v272, 0.5
        %v469 = vmul.f32 %v273, 0.5
        %v470 = vmul.f32 %v274, 0.5
        %v471 = vmul.f32 %v275, 0.5
        %v472 = vadd.f32 %v464, 0.5
        %v473 = vadd.f32 %v465, 0.5
        %v474 = vadd.f32 %v466, 0.5
        %v475 = vadd.f32 %v467, 0.5
        %v476 = vadd.f32 %v468, 0.5
        %v477 = vadd.f32 %v469, 0.5
        %v478 = vadd.f32 %v470, 0.5
        %v479 = vadd.f32 %v471, 0.5
        %v480 = vmul.f32 %v413, %v472
        %v481 = vmul.f32 %v414, %v473
        %v482 = vmul.f32 %v415, %v474
        %v483 = vmul.f32 %v416, %v475
        %v484 = vmul.f32 %v417, %v476
        %v485 = vmul.f32 %v418, %v477
        %v486 = vmul.f32 %v419, %v478
        %v487 = vmul.f32 %v420, %v479
        %v488 = vmax.f32 %v456, 0.0
        %v489 = vmax.f32 %v457, 0.0
        %v490 = vmax.f32 %v458, 0.0
        %v491 = vmax.f32 %v459, 0.0
        %v492 = vmax.f32 %v460, 0.0
        %v493 = vmax.f32 %v461, 0.0
        %v494 = vmax.f32 %v462, 0.0
        %v495 = vmax.f32 %v463, 0.0
        %v496 = vmul.f32 %v456, %v268
        %v497 = vmul.f32 %v457, %v269
        %v498 = vmul.f32 %v458, %v270
        %v499 = vmul.f32 %v459, %v271
        %v500 = vmul.f32 %v460, %v272
        %v501 = vmul.f32 %v461, %v273
        %v502 = vmul.f32 %v462, %v274
        %v503 = vmul.f32 %v463, %v275
        %v504 = vsub.f32 %v488, %v496
        %v505 = vsub.f32 %v489, %v497
        %v506 = vsub.f32 %v490, %v498
        %v507 = vsub.f32 %v491, %v499
        %v508 = vsub.f32 %v492, %v500
        %v509 = vsub.f32 %v493, %v501
        %v510 = vsub.f32 %v494, %v502
        %v511 = vsub.f32 %v495, %v503
        %v512 = vand.u32 2147483647, %v456
        %v513 = vand.u32 2147483647, %v457
        %v514 = vand.u32 2147483647, %v458
        %v515 = vand.u32 2147483647, %v459
        %v516 = vand.u32 2147483647, %v460
        %v517 = vand.u32 2147483647, %v461
        %v518 = vand.u32 2147483647, %v462
        %v519 = vand.u32 2147483647, %v463
        %v520 = vsub.f32 0.0, %v512
        %v521 = vsub.f32 0.0, %v513
        %v522 = vsub.f32 0.0, %v514
        %v523 = vsub.f32 0.0, %v515
        %v524 = vsub.f32 0.0, %v516
        %v525 = vsub.f32 0.0, %v517
        %v526 = vsub.f32 0.0, %v518
        %v527 = vsub.f32 0.0, %v519
        %v528 = vmul.f32 %v520, 1.442695
        %v529 = vpow.pop %v528
        %v530 = vmul.f32 %v521, 1.442695
        %v531 = vpow.pop %v530
        %v532 = vmul.f32 %v522, 1.442695
        %v533 = vpow.pop %v532
        %v534 = vmul.f32 %v523, 1.442695
        %v535 = vpow.pop %v534
        %v536 = vmul.f32 %v524, 1.442695
        %v537 = vpow.pop %v536
        %v538 = vmul.f32 %v525, 1.442695
        %v539 = vpow.pop %v538
        %v540 = vmul.f32 %v526, 1.442695
        %v541 = vpow.pop %v540
        %v542 = vmul.f32 %v527, 1.442695
        %v543 = vpow.pop %v542
        %v544 = vadd.f32 %v529, 1.0
        %v545 = vlog2.pop %v544
        %v546 = vmul.f32 %v545, 0.6931472
        %v547 = vmul.f32 -0.5, %v529
        %v548 = vadd.f32 %v547, 1.0
        %v549 = vmul.f32 %v548, %v529
        %v550 = vand.u32 2147483647, %v529
        %vm551 = vcmp.lt.f32.partialorder %v550, 0.0004427343
        %v552 = vsel %vm551, %v549, %v546
        %v553 = vadd.f32 %v531, 1.0
        %v554 = vlog2.pop %v553
        %v555 = vmul.f32 %v554, 0.6931472
        %v556 = vmul.f32 -0.5, %v531
        %v557 = vadd.f32 %v556, 1.0
        %v558 = vmul.f32 %v557, %v531
        %v559 = vand.u32 2147483647, %v531
        %vm560 = vcmp.lt.f32.partialorder %v559, 0.0004427343
        %v561 = vsel %vm560, %v558, %v555
        %v562 = vadd.f32 %v533, 1.0
        %v563 = vlog2.pop %v562
        %v564 = vmul.f32 %v563, 0.6931472
        %v565 = vmul.f32 -0.5, %v533
        %v566 = vadd.f32 %v565, 1.0
        %v567 = vmul.f32 %v566, %v533
        %v568 = vand.u32 2147483647, %v533
        %vm569 = vcmp.lt.f32.partialorder %v568, 0.0004427343
        %v570 = vsel %vm569, %v567, %v564
        %v571 = vadd.f32 %v535, 1.0
        %v572 = vlog2.pop %v571
        %v573 = vmul.f32 %v572, 0.6931472
        %v574 = vmul.f32 -0.5, %v535
        %v575 = vadd.f32 %v574, 1.0
        %v576 = vmul.f32 %v575, %v535
        %v577 = vand.u32 2147483647, %v535
        %vm578 = vcmp.lt.f32.partialorder %v577, 0.0004427343
        %v579 = vsel %vm578, %v576, %v573
        %v580 = vadd.f32 %v537, 1.0
        %v581 = vlog2.pop %v580
        %v582 = vmul.f32 %v581, 0.6931472
        %v583 = vmul.f32 -0.5, %v537
        %v584 = vadd.f32 %v583, 1.0
        %v585 = vmul.f32 %v584, %v537
        %v586 = vand.u32 2147483647, %v537
        %vm587 = vcmp.lt.f32.partialorder %v586, 0.0004427343
        %v588 = vsel %vm587, %v585, %v582
        %v589 = vadd.f32 %v539, 1.0
        %v590 = vlog2.pop %v589
        %v591 = vmul.f32 %v590, 0.6931472
        %v592 = vmul.f32 -0.5, %v539
        %v593 = vadd.f32 %v592, 1.0
        %v594 = vmul.f32 %v593, %v539
        %v595 = vand.u32 2147483647, %v539
        %vm596 = vcmp.lt.f32.partialorder %v595, 0.0004427343
        %v597 = vsel %vm596, %v594, %v591
        %v598 = vadd.f32 %v541, 1.0
        %v599 = vlog2.pop %v598
        %v600 = vmul.f32 %v599, 0.6931472
        %v601 = vmul.f32 -0.5, %v541
        %v602 = vadd.f32 %v601, 1.0
        %v603 = vmul.f32 %v602, %v541
        %v604 = vand.u32 2147483647, %v541
        %vm605 = vcmp.lt.f32.partialorder %v604, 0.0004427343
        %v606 = vsel %vm605, %v603, %v600
        %v607 = vadd.f32 %v543, 1.0
        %v608 = vlog2.pop %v607
        %v609 = vmul.f32 %v608, 0.6931472
        %v610 = vmul.f32 -0.5, %v543
        %v611 = vadd.f32 %v610, 1.0
        %v612 = vmul.f32 %v611, %v543
        %v613 = vand.u32 2147483647, %v543
        %vm614 = vcmp.lt.f32.partialorder %v613, 0.0004427343
        %v615 = vsel %vm614, %v612, %v609
        %v616 = vadd.f32 %v504, %v552
        %v617 = vadd.f32 %v505, %v561
        %v618 = vadd.f32 %v506, %v570
        %v619 = vadd.f32 %v507, %v579
        %v620 = vadd.f32 %v508, %v588
        %v621 = vadd.f32 %v509, %v597
        %v622 = vadd.f32 %v510, %v606
        %v623 = vadd.f32 %v511, %v615
        %v624 = vsub.f32 0.0, %v616
        %v625 = vsub.f32 0.0, %v617
        %v626 = vsub.f32 0.0, %v618
        %v627 = vsub.f32 0.0, %v619
        %v628 = vsub.f32 0.0, %v620
        %v629 = vsub.f32 0.0, %v621
        %v630 = vsub.f32 0.0, %v622
        %v631 = vsub.f32 0.0, %v623
        %v632 = vmul.f32 %v624, 1.442695
        %v633 = vpow.pop %v632
        %v634 = vmul.f32 %v625, 1.442695
        %v635 = vpow.pop %v634
        %v636 = vmul.f32 %v626, 1.442695
        %v637 = vpow.pop %v636
        %v638 = vmul.f32 %v627, 1.442695
        %v639 = vpow.pop %v638
        %v640 = vmul.f32 %v628, 1.442695
        %v641 = vpow.pop %v640
        %v642 = vmul.f32 %v629, 1.442695
        %v643 = vpow.pop %v642
        %v644 = vmul.f32 %v630, 1.442695
        %v645 = vpow.pop %v644
        %v646 = vmul.f32 %v631, 1.442695
        %v647 = vpow.pop %v646
        %v648 = vsub.f32 1.0, %v633
        %v649 = vsub.f32 1.0, %v635
        %v650 = vsub.f32 1.0, %v637
        %v651 = vsub.f32 1.0, %v639
        %v652 = vsub.f32 1.0, %v641
        %v653 = vsub.f32 1.0, %v643
        %v654 = vsub.f32 1.0, %v645
        %v655 = vsub.f32 1.0, %v647
        %v656 = vmul.f32 %v648, %v648
        %v657 = vmul.f32 %v649, %v649
        %v658 = vmul.f32 %v650, %v650
        %v659 = vmul.f32 %v651, %v651
        %v660 = vmul.f32 %v652, %v652
        %v661 = vmul.f32 %v653, %v653
        %v662 = vmul.f32 %v654, %v654
        %v663 = vmul.f32 %v655, %v655
        %v664 = vmul.f32 %v480, %v616
        %v665 = vmul.f32 %v481, %v617
        %v666 = vmul.f32 %v482, %v618
        %v667 = vmul.f32 %v483, %v619
        %v668 = vmul.f32 %v484, %v620
        %v669 = vmul.f32 %v485, %v621
        %v670 = vmul.f32 %v486, %v622
        %v671 = vmul.f32 %v487, %v623
        %v672 = vmul.f32 %v656, %v664
        %v673 = vmul.f32 %v657, %v665
        %v674 = vmul.f32 %v658, %v666
        %v675 = vmul.f32 %v659, %v667
        %v676 = vmul.f32 %v660, %v668
        %v677 = vmul.f32 %v661, %v669
        %v678 = vmul.f32 %v662, %v670
        %v679 = vmul.f32 %v663, %v671
        %v680 = vlaneseq
        %v681 = vshrl.u32 %v680, 7
        %v682 = vadd.s32 %v681, 8
        %v683 = vadd.s32 %v681, 16
        %v684 = vadd.s32 %v681, 24
        %s685 = smul.u32 %s24, 32
        %v686 = vstv %s685
        %v687 = vadd.s32 %v681, %v686
        %v688 = vadd.s32 %v682, %v686
        %v689 = vadd.s32 %v683, %v686
        %v690 = vadd.s32 %v684, %v686
        %vm691 = vcmp.lt.s32.totalorder %v687, 48
        %vm692 = vcmp.lt.s32.totalorder %v688, 48
        %vm693 = vcmp.lt.s32.totalorder %v689, 48
        %vm694 = vcmp.lt.s32.totalorder %v690, 48
        %v695 = vsel %vm691, 1, 0
        %v696 = vsel %vm692, 1, 0
        %v697 = vsel %vm693, 1, 0
        %v698 = vsel %vm694, 1, 0
        %vm699 = vcmp.eq.s32.totalorder %v695, 1
        %vm700 = vcmp.eq.s32.totalorder %v696, 1
        %vm701 = vcmp.eq.s32.totalorder %v697, 1
        %vm702 = vcmp.eq.s32.totalorder %v698, 1
        %v703 = vsel %vm699, %v672, 0.0
        %v704 = vsel %vm699, %v673, 0.0
        %v705 = vsel %vm700, %v674, 0.0
        %v706 = vsel %vm700, %v675, 0.0
        %v707 = vsel %vm701, %v676, 0.0
        %v708 = vsel %vm701, %v677, 0.0
        %v709 = vsel %vm702, %v678, 0.0
        %v710 = vsel %vm702, %v679, 0.0
        %v711 = vadd.f32 %v703, %v705
        %v712 = vadd.f32 %v704, %v706
        %v713 = vadd.f32 %v711, %v707
        %v714 = vadd.f32 %v712, %v708
        %v715 = vadd.f32 %v713, %v709
        %v716 = vadd.f32 %v714, %v710
        %v717 = vadd.f32 %v715, %v716
        %718 = vst [vmem:[%s257] sm:$0xff] %v717
        %s719 = sand.u32 %s126, 1
        %s720 = scalar_lea.sflag [#allocation4], %s719
        %s721 = sand.u32 %s126, 1
        %s722 = smul.addr %s721, 8
        %s723 = scalar_lea.vmem [#allocation7], %s722
        // Predicated region
        $region45: #{tpu_custom_call.1} parent=35 // pred_check
          %p724 = pneg %p136
        $region46: #{tpu_custom_call.1} parent=35 // pred_check_branch
          %726 = sbr.rel (%p724) target = $region48
        $region47: #{tpu_custom_call.1} parent=35 // pred_region
          %s728 = ssub.s32 128, 128
          %729 = vsyncadd %s720, %s728
          %s730 = smul.addr %s24, 128
          %s731 = scalar_lea.hbm %s4, %s730
          %s733 = sshll.u32 %s723, 4
          %s734 = int_to_ptr.vmem [resolvable:$true] %s733
          %736 = dma.vmem_to_hbm [thread:$0]  %s734, 128, %s731, %s720
        $region48: #{tpu_custom_call.1} parent=35 // pred_fallthru
          _
      $region36: #{tpu_custom_call.1} parent=5 // pred_fallthru
        _
      %p737 = scmp.le.s32.totalorder 2, %s19
      // Predicated region
      $region49: #{tpu_custom_call.1} parent=5 // pred_check
        %p738 = pneg %p737
      $region50: #{tpu_custom_call.1} parent=5 // pred_check_branch
        %740 = sbr.rel (%p738) target = $region52
      $region51: #{tpu_custom_call.1} parent=5 // pred_region
        %s741 = ssub.s32 %s19, 2
        // Predicated region
        $region53: #{tpu_custom_call.1} parent=51 // pred_check
          %p742 = pneg %p142
        $region54: #{tpu_custom_call.1} parent=51 // pred_check_branch
          %744 = sbr.rel (%p742) target = $region56
        $region55: #{tpu_custom_call.1} parent=51 // pred_region
          %s745 = sand.u32 %s127, 1
          %s746 = scalar_lea.sflag [#allocation4], %s745
          %s747 = sand.u32 %s127, 1
          %s748 = smul.addr %s747, 8
          %s749 = scalar_lea.vmem [#allocation7], %s748
          %750 = dma.done %s746, 128
        $region56: #{tpu_custom_call.1} parent=51 // pred_fallthru
          _
      $region52: #{tpu_custom_call.1} parent=5 // pred_fallthru
        _
    $region6: #{tpu_custom_call.1} parent=1 // loop_footer
      %s23 = sadd.s32 1, %s19
    $region7: #{tpu_custom_call.1} parent=1 // loop_footer_branch
      %18 = sbr.rel target = $region3
    $region8: #{tpu_custom_call.1} parent=1 // loop_exit
      _
    %751 = vsyncpa [#allocation3], 1
    %s752 = scalar_lea.sflag [#allocation3], 1
    %753 = vsyncpa %s752, 1
    %754 = vsyncpa [#allocation6], 1
    %s755 = scalar_lea.sflag [#allocation6], 1
    %756 = vsyncpa %s755, 1
    %757 = vsyncpa [#allocation4], 1
    %s758 = scalar_lea.sflag [#allocation4], 1
    %759 = vsyncpa %s758, 1

</llo_original>
